<compile_context>
chip_gen: v7x
topology: tpu7x:2x2x1
jax: 0.10.0
libtpu: 0.0.40
codegen_flags: <defaults>
</compile_context>

<pallas_src>
import jax
import jax.numpy as jnp
from jax.experimental import pallas as pl
from jax.experimental.pallas import tpu as pltpu


def _round_up(x, m):
    return (x + m - 1) // m * m


def _vmem_capacity_bytes():
    """Per-core VMEM capacity; conservative 64 MiB (v7x) fallback."""
    try:
        info = pltpu.get_tpu_info()
        cap = getattr(info, "vmem_capacity_bytes", None)
        if cap:
            return int(cap)
    except Exception:
        pass
    return 64 << 20


def _working_set_bytes(bm, S, H, tv):
    # One buffer each of: hidden (bf16), weight tile (bf16), output tile (f32),
    # error-weight + folded-bias tiles (f32). Double-buffered by the pipeline.
    one = bm * S * H * 2 + H * tv * 2 + bm * S * tv * 4 + 2 * bm * tv * 4
    return 2 * one


def _pick_tv(bm, S, H, V, budget):
    v_tile_cap = _round_up(V, 128)
    for cand in (4096, 2048, 1024, 512, 256, 128):
        t = min(cand, v_tile_cap)
        if _working_set_bytes(bm, S, H, t) <= budget:
            # Megacore balance: prefer >= 4 vocab tiles when vocab is large.
            while t >= 2048 and pl.cdiv(V, t) < 4:
                t //= 2
            return t
    return min(128, v_tile_cap)


def _correction_kernel(hid_ref, w_ref, ew_ref, bw_ref, o_ref):
    # hid_ref: (bm, S, H) bf16   w_ref: (H, tv) bf16
    # ew_ref / bw_ref: (bm, 1, tv) f32   o_ref: (bm, S, tv) f32
    bm, S, H = hid_ref.shape
    tv = w_ref.shape[1]
    # Pack bm batch rows into the MXU M dimension (bm*S rows per matmul).
    hid = hid_ref[...].reshape(bm * S, H)
    logits = jnp.dot(hid, w_ref[...],
                     preferred_element_type=jnp.float32)      # bf16 x bf16 -> f32
    logits = logits.reshape(bm, S, tv)
    # (logits + bias) * ew == logits*ew + bias*ew ; bw = bias*ew precomputed (f32).
    o_ref[...] = logits * ew_ref[...] + bw_ref[...]


def prepare_dense_params(dense_w):
    """One-time (init-time) prep: store the [H, V] dense weight in bf16 for the MXU."""
    return dense_w.astype(jnp.bfloat16)


def correction_forward(bert_last_hidden, detect_hidden, dense_w_bf16, dense_b,
                       error_weight, *, tv=None):
    """Pallas implementation of the CorrectionNetwork numeric forward path."""
    B, S, H = bert_last_hidden.shape
    V = dense_w_bf16.shape[1]

    if dense_w_bf16.dtype != jnp.bfloat16:
        # Ideally done once at init via prepare_dense_params(); cast defensively.
        dense_w_bf16 = dense_w_bf16.astype(jnp.bfloat16)

    # Hoist the elementwise add out of the kernel and feed the MXU bf16 operands.
    hidden = (bert_last_hidden + detect_hidden).astype(jnp.bfloat16)

    # Fold the bias into the broadcast epilogue (kept in f32).
    ew3 = error_weight[:, None, :].astype(jnp.float32)                     # (B,1,V)
    bw3 = (dense_b[None, :].astype(jnp.float32) * ew3[:, 0, :])[:, None, :]  # (B,1,V)

    # Block sizing against the actual chip's VMEM.
    vcap = _vmem_capacity_bytes()
    budget = int(0.60 * vcap)
    # Small/medium batch: keep the whole hidden tensor VMEM-resident
    # (constant index_map -> fetched once, matmul M = B*S, no odd-B issue).
    bm = B if (B * S * H * 2 <= (2 << 20) and B * S <= 1024) else min(2, B)
    if tv is None:
        tv = _pick_tv(bm, S, H, V, budget)
    tv = min(_round_up(tv, 128), _round_up(V, 128))

    # Vocab tiles outer ("parallel" -> megacore shards vocab), batch inner ->
    # the (H, tv) weight tile stays VMEM-resident across batch steps.
    grid = (pl.cdiv(V, tv), pl.cdiv(B, bm))

    n_vtiles = grid[0]
    flops = 2 * B * S * H * V
    bytes_accessed = (H * V * 2                                    # bf16 weight stream
                      + B * S * H * 2 * (1 if bm == B else n_vtiles)  # hidden reads
                      + B * S * V * 4                              # output
                      + 2 * B * V * 4)                             # ew + folded bias
    vmem_limit = int(min(max(_working_set_bytes(bm, S, H, tv) + (4 << 20), 16 << 20),
                         int(0.85 * vcap)))

    out = pl.pallas_call(
        _correction_kernel,
        out_shape=jax.ShapeDtypeStruct((B, S, V), jnp.float32),
        grid_spec=pltpu.PrefetchScalarGridSpec(
            num_scalar_prefetch=0,
            grid=grid,
            in_specs=[
                pl.BlockSpec((bm, S, H), lambda j, b: (b, 0, 0)),   # hidden (bf16)
                pl.BlockSpec((H, tv), lambda j, b: (0, j)),         # weight (bf16)
                pl.BlockSpec((bm, 1, tv), lambda j, b: (b, 0, j)),  # error weight
                pl.BlockSpec((bm, 1, tv), lambda j, b: (b, 0, j)),  # bias * error weight
            ],
            out_specs=pl.BlockSpec((bm, S, tv), lambda j, b: (b, 0, j)),
        ),
        compiler_params=pltpu.CompilerParams(
            dimension_semantics=("parallel", "arbitrary"),
            vmem_limit_bytes=vmem_limit),
        cost_estimate=pl.CostEstimate(flops=flops, transcendentals=0,
                                      bytes_accessed=bytes_accessed),
    )(hidden, dense_w_bf16, ew3, bw3)

    return out   # already exactly (B, S, V): no post-kernel slice


if __name__ == "__main__":
    # Small, deterministic shapes consistent with the module's forward:
    # batch B=2, seq S=8 (stand-in for max_length=128), hidden H=32 (stand-in
    # for BERT hidden 768), vocab V=250 (non-128-multiple, stand-in for 23236,
    # exercises the masked partial vocab tile).
    B, S, H, V = 2, 8, 32, 250

    key = jax.random.PRNGKey(0)
    k1, k2, k3, k4, k5 = jax.random.split(key, 5)

    bert_last_hidden = jax.random.normal(k1, (B, S, H), dtype=jnp.float32)
    detect_hidden = jax.random.normal(k2, (B, S, H), dtype=jnp.float32)
    # nn.Linear(H, V): PyTorch weight is [V, H]; we store its transpose [H, V].
    dense_w = jax.random.normal(k3, (H, V), dtype=jnp.float32) * (1.0 / jnp.sqrt(H))
    dense_b = jax.random.normal(k4, (V,), dtype=jnp.float32) * 0.02
    # TODO(synk): cal_error_weight needs the JSON corpus + tokenizer (host-side);
    # error_weight is supplied precomputed (baseline ones + small increments).
    error_weight = 1.0 + 0.1 * jax.random.uniform(k5, (B, V), dtype=jnp.float32)

    # One-time init-style weight prep (bf16 for the MXU), outside the hot path.
    dense_w_bf16 = jax.block_until_ready(prepare_dense_params(dense_w))

    out = correction_forward(bert_last_hidden, detect_hidden, dense_w_bf16,
                             dense_b, error_weight)
    out = jax.block_until_ready(out)

    # Pure-JAX reference mirroring the bf16 matmul operands (f32 accumulate).
    ref_hidden = (bert_last_hidden + detect_hidden).astype(jnp.bfloat16).astype(jnp.float32)
    ref_w = dense_w_bf16.astype(jnp.float32)
    ref = (jnp.einsum("bsh,hv->bsv", ref_hidden, ref_w) + dense_b) \
          * error_weight[:, None, :]
    assert out.shape == (B, S, V)
    assert jnp.allclose(out, ref, atol=1e-2, rtol=1e-2), "mismatch vs reference"

    print("KERNEL_OK")
</pallas_src>

<mosaic_0001>
module attributes {stable_mosaic.version = 11 : i64} {
  func.func @_correction_kernel(%arg0: i32, %arg1: i32, %arg2: memref<2x8x32xbf16, #tpu.memory_space<vmem>>, %arg3: memref<32x256xbf16, #tpu.memory_space<vmem>>, %arg4: memref<2x1x256xf32, #tpu.memory_space<vmem>>, %arg5: memref<2x1x256xf32, #tpu.memory_space<vmem>>, %arg6: memref<2x8x256xf32, #tpu.memory_space<vmem>>) attributes {dimension_semantics = [#tpu.dimension_semantics<parallel>, #tpu.dimension_semantics<arbitrary>], iteration_bounds = array<i64: 1, 1>, scalar_prefetch = 0 : i64, scratch_operands = 0 : i64, tpu.core_type = #tpu.core_type<tc>, window_params = [{transform_indices = @transform_0, window_bounds = array<i64: 2, 8, 32>}, {transform_indices = @transform_1, window_bounds = array<i64: 32, 256>}, {transform_indices = @transform_2, window_bounds = array<i64: 2, 1, 256>}, {transform_indices = @transform_3, window_bounds = array<i64: 2, 1, 256>}, {transform_indices = @transform_4, window_bounds = array<i64: 2, 8, 256>}]} {
    %c0 = arith.constant 0 : index
    %c0_0 = arith.constant 0 : index
    %c0_1 = arith.constant 0 : index
    %0 = vector.load %arg2[%c0, %c0_0, %c0_1] : memref<2x8x32xbf16, #tpu.memory_space<vmem>>, vector<2x8x32xbf16>
    %1 = vector.shape_cast %0 : vector<2x8x32xbf16> to vector<16x32xbf16>
    %c0_2 = arith.constant 0 : index
    %c0_3 = arith.constant 0 : index
    %2 = vector.load %arg3[%c0_2, %c0_3] : memref<32x256xbf16, #tpu.memory_space<vmem>>, vector<32x256xbf16>
    %cst = arith.constant dense<0.000000e+00> : vector<16x256xf32>
    %3 = tpu.matmul %1, %2, %cst {dimension_numbers = #tpu.dot_dimension_numbers<[1], [0], [0], [1], [0, 0, 1, 1], [], []>} : vector<16x32xbf16>, vector<32x256xbf16>, vector<16x256xf32> -> vector<16x256xf32>
    %4 = vector.shape_cast %3 : vector<16x256xf32> to vector<2x8x256xf32>
    %c0_4 = arith.constant 0 : index
    %c0_5 = arith.constant 0 : index
    %c0_6 = arith.constant 0 : index
    %5 = vector.load %arg4[%c0_4, %c0_5, %c0_6] : memref<2x1x256xf32, #tpu.memory_space<vmem>>, vector<2x1x256xf32>
    %6 = vector.broadcast %5 : vector<2x1x256xf32> to vector<2x8x256xf32>
    %7 = arith.mulf %4, %6 : vector<2x8x256xf32>
    %c0_7 = arith.constant 0 : index
    %c0_8 = arith.constant 0 : index
    %c0_9 = arith.constant 0 : index
    %8 = vector.load %arg5[%c0_7, %c0_8, %c0_9] : memref<2x1x256xf32, #tpu.memory_space<vmem>>, vector<2x1x256xf32>
    %9 = vector.broadcast %8 : vector<2x1x256xf32> to vector<2x8x256xf32>
    %10 = arith.addf %7, %9 : vector<2x8x256xf32>
    %c0_10 = arith.constant 0 : index
    %c0_11 = arith.constant 0 : index
    %c0_12 = arith.constant 0 : index
    %11 = vector.load %arg6[%c0_10, %c0_11, %c0_12] : memref<2x8x256xf32, #tpu.memory_space<vmem>>, vector<2x8x256xf32>
    tpu.vector_store %arg6[%c0_10, %c0_11, %c0_12], %10 {strides = array<i32>} : memref<2x8x256xf32, #tpu.memory_space<vmem>>, vector<2x8x256xf32>,
    return
  }
  func.func @transform_0(%arg0: i32, %arg1: i32) -> (i32, i32, i32) {
    %c0_i32 = arith.constant 0 : i32
    %c0_i32_0 = arith.constant 0 : i32
    %c0_i32_1 = arith.constant 0 : i32
    return %arg1, %c0_i32, %c0_i32_0 : i32, i32, i32
  }
  func.func @transform_1(%arg0: i32, %arg1: i32) -> (i32, i32) {
    %c0_i32 = arith.constant 0 : i32
    %c0_i32_0 = arith.constant 0 : i32
    return %c0_i32, %arg0 : i32, i32
  }
  func.func @transform_2(%arg0: i32, %arg1: i32) -> (i32, i32, i32) {
    %c0_i32 = arith.constant 0 : i32
    %c0_i32_0 = arith.constant 0 : i32
    return %arg1, %c0_i32, %arg0 : i32, i32, i32
  }
  func.func @transform_3(%arg0: i32, %arg1: i32) -> (i32, i32, i32) {
    %c0_i32 = arith.constant 0 : i32
    %c0_i32_0 = arith.constant 0 : i32
    return %arg1, %c0_i32, %arg0 : i32, i32, i32
  }
  func.func @transform_4(%arg0: i32, %arg1: i32) -> (i32, i32, i32) {
    %c0_i32 = arith.constant 0 : i32
    %c0_i32_0 = arith.constant 0 : i32
    return %arg1, %c0_i32, %arg0 : i32, i32, i32
  }
}

</mosaic_0001>

<llo_original>
// kernel: tpu_custom_call.1
$region0: #{tpu_custom_call.1}
  #allocation0 [shape = 'u32[]', space=smem, size = 0x4, offset = 0x4, fixed_abs, tag = 'smem constant byte address 0x4 - core index']
  #allocation1 [shape = 'u32[144,128]{1,0:T(1,128)}', space=vmem, size = 0x12000, scoped, tag = 'internal scratch']
  %s0 = inlined_call_operand.hbm [shape: bf16[2,8,32], index: 0, kind: input, shape index: {}]
  %s1 = inlined_call_operand.hbm [shape: bf16[32,250], index: 1, kind: input, shape index: {}]
  %s2 = inlined_call_operand.vmem [shape: f32[2,1,250], index: 2, kind: input, shape index: {}]
  %s3 = inlined_call_operand.vmem [shape: f32[2,1,250], index: 3, kind: input, shape index: {}]
  %s4 = inlined_call_operand.hbm [shape: f32[2,8,250], index: 4, kind: output, shape index: {}]
  %s5 = sld [smem:[#allocation0]]
  $region34: #{tpu_custom_call.1} parent=0
    _
  %s7 = ssub.s32 1, %s5
  %s8 = scalar_select 0, %s7, %s5
  $region1: #{tpu_custom_call.1} parent=0
    #allocation2 [shape = 'u8[4096]{0}', space=vmem, size = 0x1000, scoped, tag = 'input window, operand 0, single buffered']
    #allocation3 [shape = 's32[1]{0}', space=sflag, size = 0x4, scoped, tag = 'scoped memory for tpu_custom_call.1']
    #allocation4 [shape = 's32[1]{0}', space=sflag, size = 0x4, scoped, tag = 'scoped memory for tpu_custom_call.1']
    #allocation5 [shape = 'u8[16384]{0}', space=vmem, size = 0x4000, scoped, tag = 'input window, operand 1, single buffered']
    #allocation6 [shape = 's32[1]{0}', space=sflag, size = 0x4, scoped, tag = 'scoped memory for tpu_custom_call.1']
    #allocation7 [shape = 'u8[16384]{0}', space=vmem, size = 0x4000, scoped, tag = 'output window, operand 0, single buffered']
    %9 = vsyncpa [#allocation3], 0
    %10 = vsyncpa [#allocation6], 0
    %11 = vsyncpa [#allocation4], 0
    // Predicated region
    $region2: #{tpu_custom_call.1} parent=1 // pred_check
      _
    $region3: #{tpu_custom_call.1} parent=1 // pred_check_branch
      %13 = sbr.rel (0) target = $region5
    $region4: #{tpu_custom_call.1} parent=1 // pred_region
      %s15 = ssub.s32 128, 128
      %16 = vsyncadd [#allocation3], %s15
      %s17 = sshll.u32 [#allocation2], 4
      %s18 = int_to_ptr.vmem [resolvable:$true] %s17
      %23 = dma.hbm_to_vmem [thread:$0]  %s0, 128, %s18, [#allocation3], 64, 64, 4
    $region5: #{tpu_custom_call.1} parent=1 // pred_fallthru
      _
    // Predicated region
    $region6: #{tpu_custom_call.1} parent=1 // pred_check
      _
    $region7: #{tpu_custom_call.1} parent=1 // pred_check_branch
      %25 = sbr.rel (0) target = $region9
    $region8: #{tpu_custom_call.1} parent=1 // pred_region
      %s27 = ssub.s32 512, 512
      %28 = vsyncadd [#allocation6], %s27
      %s29 = sshll.u32 [#allocation5], 4
      %s30 = int_to_ptr.vmem [resolvable:$true] %s29
      %35 = dma.hbm_to_vmem [thread:$0]  %s1, 512, %s30, [#allocation6], 128, 128, 8
    $region9: #{tpu_custom_call.1} parent=1 // pred_fallthru
      _
    // Predicated region
    $region10: #{tpu_custom_call.1} parent=1 // pred_check
      _
    $region11: #{tpu_custom_call.1} parent=1 // pred_check_branch
      %37 = sbr.rel (0) target = $region13
    $region12: #{tpu_custom_call.1} parent=1 // pred_region
      _
    $region13: #{tpu_custom_call.1} parent=1 // pred_fallthru
      _
    // Predicated region
    $region14: #{tpu_custom_call.1} parent=1 // pred_check
      _
    $region15: #{tpu_custom_call.1} parent=1 // pred_check_branch
      %39 = sbr.rel (0) target = $region17
    $region16: #{tpu_custom_call.1} parent=1 // pred_region
      _
    $region17: #{tpu_custom_call.1} parent=1 // pred_fallthru
      _
    // Predicated region
    $region18: #{tpu_custom_call.1} parent=1 // pred_check
      _
    $region19: #{tpu_custom_call.1} parent=1 // pred_check_branch
      %41 = sbr.rel (0) target = $region21
    $region20: #{tpu_custom_call.1} parent=1 // pred_region
      %42 = dma.done [#allocation3], 128
    $region21: #{tpu_custom_call.1} parent=1 // pred_fallthru
      _
    // Predicated region
    $region22: #{tpu_custom_call.1} parent=1 // pred_check
      _
    $region23: #{tpu_custom_call.1} parent=1 // pred_check_branch
      %44 = sbr.rel (0) target = $region25
    $region24: #{tpu_custom_call.1} parent=1 // pred_region
      %45 = dma.done [#allocation6], 512
    $region25: #{tpu_custom_call.1} parent=1 // pred_fallthru
      _
    %v47 = vld [vmem:[#allocation2] sm:$0xf]
    %v48 = vld [vmem:[#allocation2 + $0x4] sm:$0xf]
    %v49 = vld [vmem:[#allocation5] sm:$0xff]
    %v50 = vld [vmem:[#allocation5 + $0x8] sm:$0xff]
    %v51 = vld [vmem:[#allocation5 + $0x10] sm:$0xff]
    %v52 = vld [vmem:[#allocation5 + $0x18] sm:$0xff]
    %v55 = vunpack.c.l.b16 %v47
    %v56 = vunpack.c.l.b16 %v48
    %v57 = vpack.c.b16 %v56, %v55
    %v62 = vunpack.c.l.b16 %v49
    %v63 = vunpack.c.h.b16 %v49
    %v64 = vunpack.c.l.b16 %v50
    %v65 = vunpack.c.h.b16 %v50
    %v66 = vunpack.c.l.b16 %v51
    %v67 = vunpack.c.h.b16 %v51
    %v68 = vunpack.c.l.b16 %v52
    %v69 = vunpack.c.h.b16 %v52
    %v70 = vpack.c.b16 %v64, %v62
    %v71 = vpack.c.b16 %v65, %v63
    %v72 = vpack.c.b16 %v68, %v66
    %v73 = vpack.c.b16 %v69, %v67
    %vm78 = vcmask 261120
    %v80 = vsel %vm78, %v57, 0
    %82 = vmatprep.subr.bf16.mxu0 %v71
    %83 = vmatpush1.bf16.msra.mxu0 %v70
    %84 = vmatprep.subr.bf16.mxu0 %v73
    %85 = vmatpush1.bf16.msra.mxu0 %v72
    %86 = vmatprep.subr.bf16.mxu0 0
    %87 = vmatpush1.bf16.msra.mxu0 0
    %88 = vmatprep.subr.bf16.mxu0 0
    %89 = vmatpush1.bf16.msra.mxu0 0
    %90 = vmatprep.subr.bf16.mxu0 0
    %91 = vmatpush1.bf16.msra.mxu0 0
    %92 = vmatprep.subr.bf16.mxu0 0
    %93 = vmatpush1.bf16.msra.mxu0 0
    %94 = vmatprep.subr.bf16.mxu0 0
    %95 = vmatpush1.bf16.msra.mxu0 0
    %96 = vmatprep.subr.bf16.mxu0 0
    %97 = vmatpush1.bf16.msra.mxu0 0
    %98 = vmatprep.subr.bf16.mxu0 0
    %99 = vmatpush1.bf16.msra.mxu0 0
    %100 = vmatprep.subr.bf16.mxu0 0
    %101 = vmatpush1.bf16.msra.mxu0 0
    %102 = vmatprep.subr.bf16.mxu0 0
    %103 = vmatpush1.bf16.msra.mxu0 0
    %104 = vmatprep.subr.bf16.mxu0 0
    %105 = vmatpush1.bf16.msra.mxu0 0
    %106 = vmatprep.subr.bf16.mxu0 0
    %107 = vmatpush1.bf16.msra.mxu0 0
    %108 = vmatprep.subr.bf16.mxu0 0
    %109 = vmatpush1.bf16.msra.mxu0 0
    %110 = vmatprep.subr.bf16.mxu0 0
    %111 = vmatpush1.bf16.msra.mxu0 0
    %112 = vmatprep.subr.bf16.mxu0 0
    %113 = vmatpush1.bf16.msra.mxu0 0
    %114 = vmatprep.mubr.bf16.mxu0 0
    %115 = vmatmul.mubr.bf16.gmra.mrb[0].mxu0 %v80
    %v116 = vpop.f32.mrb[0].mxu0
    %v117 = vadd.f32 0.0, %v116
    %v118 = vpop.f32.mrb[0].mxu0
    %v119 = vadd.f32 0.0, %v118
    %v120 = vpop.f32.mrb[0].mxu0
    %v121 = vadd.f32 0.0, %v120
    %v122 = vpop.f32.mrb[0].mxu0
    %v123 = vadd.f32 0.0, %v122
    %124 = vdwg.mxu0
    %v125 = vld [vmem:[%s2] sm:$0x3]
    %v126 = vld [vmem:[%s2 + $0x2] sm:$0x3]
    %v129 = vlaneseq
    %v130 = vshrl.u32 %v129, 7
    %v131 = vsub.s32 0, %v130
    %v132 = vrot.slane %v125, %v131
    %v133 = vlaneseq
    %v134 = vshrl.u32 %v133, 7
    %v135 = vsub.s32 1, %v134
    %v136 = vrot.slane %v125, %v135
    %v137 = vlaneseq
    %v138 = vshrl.u32 %v137, 7
    %v139 = vsub.s32 0, %v138
    %v140 = vrot.slane %v126, %v139
    %v141 = vlaneseq
    %v142 = vshrl.u32 %v141, 7
    %v143 = vsub.s32 1, %v142
    %v144 = vrot.slane %v126, %v143
    %v149 = vmul.f32 %v117, %v132
    %v150 = vmul.f32 %v119, %v136
    %v151 = vmul.f32 %v121, %v140
    %v152 = vmul.f32 %v123, %v144
    %v153 = vld [vmem:[%s3] sm:$0x3]
    %v154 = vld [vmem:[%s3 + $0x2] sm:$0x3]
    %v157 = vlaneseq
    %v158 = vshrl.u32 %v157, 7
    %v159 = vsub.s32 0, %v158
    %v160 = vrot.slane %v153, %v159
    %v161 = vlaneseq
    %v162 = vshrl.u32 %v161, 7
    %v163 = vsub.s32 1, %v162
    %v164 = vrot.slane %v153, %v163
    %v165 = vlaneseq
    %v166 = vshrl.u32 %v165, 7
    %v167 = vsub.s32 0, %v166
    %v168 = vrot.slane %v154, %v167
    %v169 = vlaneseq
    %v170 = vshrl.u32 %v169, 7
    %v171 = vsub.s32 1, %v170
    %v172 = vrot.slane %v154, %v171
    %v177 = vadd.f32 %v149, %v160
    %v178 = vadd.f32 %v150, %v164
    %v179 = vadd.f32 %v151, %v168
    %v180 = vadd.f32 %v152, %v172
    %181 = vst [vmem:[#allocation7] sm:$0xff] %v177
    %182 = vst [vmem:[#allocation7 + $0x8] sm:$0xff] %v178
    %183 = vst [vmem:[#allocation7 + $0x10] sm:$0xff] %v179
    %184 = vst [vmem:[#allocation7 + $0x18] sm:$0xff] %v180
    // Predicated region
    $region26: #{tpu_custom_call.1} parent=1 // pred_check
      _
    $region27: #{tpu_custom_call.1} parent=1 // pred_check_branch
      %186 = sbr.rel (0) target = $region29
    $region28: #{tpu_custom_call.1} parent=1 // pred_region
      %s188 = ssub.s32 512, 512
      %189 = vsyncadd [#allocation4], %s188
      %s190 = sshll.u32 [#allocation7], 4
      %s191 = int_to_ptr.vmem [resolvable:$true] %s190
      %196 = dma.vmem_to_hbm [thread:$0]  %s191, 512, %s4, [#allocation4], 256, 256, 16
    $region29: #{tpu_custom_call.1} parent=1 // pred_fallthru
      _
    // Predicated region
    $region30: #{tpu_custom_call.1} parent=1 // pred_check
      _
    $region31: #{tpu_custom_call.1} parent=1 // pred_check_branch
      %198 = sbr.rel (0) target = $region33
    $region32: #{tpu_custom_call.1} parent=1 // pred_region
      %199 = dma.done [#allocation4], 512
    $region33: #{tpu_custom_call.1} parent=1 // pred_fallthru
      _
    %200 = vsyncpa [#allocation3], 1
    %201 = vsyncpa [#allocation6], 1
    %202 = vsyncpa [#allocation4], 1

</llo_original>
